<compile_context>
chip_gen: v6e
topology: v6e:2x2x1
jax: 0.10.0
libtpu: 0.0.40
codegen_flags: <defaults>
</compile_context>

<pallas_src>
import functools

import jax
import jax.numpy as jnp
from jax.experimental import pallas as pl
from jax.experimental.pallas import tpu as pltpu


def _spectral_kernel(xr_ref, w_ref, o_ref, *, n_in, n_modes, n_half):
    """Fourier-mode channel contraction with fused zero-padded tail.

    xr_ref : (Bt, Ci, M)     real part of rfft(x)[..., :M]   (M on lanes)
    w_ref  : (Ci, Co, M)     weights in native PyTorch layout (M on lanes)
    o_ref  : (Bt, Co, half)  real output spectrum; columns [M, half) == 0
    """
    bt = xr_ref.shape[0]
    co = w_ref.shape[1]

    # out[b, o, m] = sum_i xr[b, i, m] * w[i, o, m]
    # Ci is a small static constant -> fully unrolled, every ref index static.
    acc = jnp.zeros((bt, co, n_modes), jnp.float32)
    for i in range(n_in):
        xi = xr_ref[:, i, :]                      # (Bt, M)
        wi = w_ref[i, :, :]                       # (Co, M)
        acc = acc + xi[:, None, :] * wi[None, :, :]

    if n_half > n_modes:
        # Fuse the zero tail of the spectrum into a single lane-dense store.
        tail = jnp.zeros((bt, co, n_half - n_modes), jnp.float32)
        o_ref[...] = jnp.concatenate([acc, tail], axis=-1)
    else:
        o_ref[...] = acc


def _spectral_contract(xr, w, n_half):
    """xr: (B, Ci, M) f32, w: (Ci, Co, M) f32 -> (B, Co, n_half) f32 real spectrum."""
    B, Ci, M = xr.shape
    Co = w.shape[1]

    # Batch tile: per-step VMEM footprint is tiny at FNO sizes
    # (Bt*Ci*M + Ci*Co*M + Bt*Co*half floats), so the default scoped VMEM
    # limit is comfortable even on v7x's 64 MiB VMEM.
    Bt = min(B, 8)
    grid = (pl.cdiv(B, Bt),)

    kernel = functools.partial(
        _spectral_kernel, n_in=Ci, n_modes=M, n_half=n_half
    )

    flops = 2 * B * Ci * Co * M
    bytes_accessed = 4 * (B * Ci * M + Ci * Co * M + B * Co * n_half)

    return pl.pallas_call(
        kernel,
        out_shape=jax.ShapeDtypeStruct((B, Co, n_half), jnp.float32),
        grid=grid,
        in_specs=[
            # Last-two block dims equal the full array dims -> legal regardless
            # of (8, 128) alignment.
            pl.BlockSpec((Bt, Ci, M), lambda b: (b, 0, 0)),
            # Weights: same block every step -> kept resident, no re-DMA.
            pl.BlockSpec((Ci, Co, M), lambda b: (0, 0, 0)),
        ],
        out_specs=pl.BlockSpec((Bt, Co, n_half), lambda b: (b, 0, 0)),
        compiler_params=pltpu.CompilerParams(
            dimension_semantics=("parallel",)
        ),
        cost_estimate=pl.CostEstimate(
            flops=flops, transcendentals=0, bytes_accessed=bytes_accessed
        ),
    )(xr, w)


def spectral_conv1d_forward(x, weights1):
    """x: (B, C_in, N) float32 (NCW, same as PyTorch). Returns (B, C_out, N)."""
    B, Ci, N = x.shape
    _, Co, M = weights1.shape
    half = N // 2 + 1

    # TODO(synk): no Pallas FFT primitive; rfft/irfft stay in XLA.
    x_ft = jnp.fft.rfft(x.astype(jnp.float32), axis=-1)        # (B, Ci, half) complex64

    # Only the real part survives (PyTorch copy_ into a real out_ft).
    xr = jnp.real(x_ft[:, :, :M]).astype(jnp.float32)           # (B, Ci, M), natural layout

    # Kernel emits the full zero-padded real spectrum directly.
    out_ft = _spectral_contract(xr, weights1.astype(jnp.float32), half)  # (B, Co, half)

    return jnp.fft.irfft(out_ft, n=N, axis=-1)                  # (B, Co, N)


if __name__ == "__main__":
    key = jax.random.PRNGKey(0)
    B, Ci, Co, N, M = 2, 4, 4, 16, 8
    kx, kw = jax.random.split(key)

    x = jax.random.normal(kx, (B, Ci, N), dtype=jnp.float32)
    # __init__: scale * rand(in_channels, out_channels, modes1), uniform [0, 1)
    scale = 1.0 / (Ci * Co)
    weights1 = scale * jax.random.uniform(kw, (Ci, Co, M), dtype=jnp.float32)

    y = jax.block_until_ready(spectral_conv1d_forward(x, weights1))

    # Pure-JAX reference of the same semantics.
    x_ft = jnp.fft.rfft(x, axis=-1)
    ref_modes = jnp.einsum("bim,iom->bom", jnp.real(x_ft[:, :, :M]), weights1)
    out_ft_ref = jnp.zeros((B, Co, N // 2 + 1), jnp.float32).at[:, :, :M].set(ref_modes)
    y_ref = jnp.fft.irfft(out_ft_ref, n=N, axis=-1)

    assert y.shape == (B, Co, N)
    assert jnp.allclose(y, y_ref, atol=1e-5, rtol=1e-5)
    print("KERNEL_OK")
</pallas_src>

<mosaic_0001>
module attributes {stable_mosaic.version = 11 : i64} {
  func.func @_spectral_kernel(%arg0: i32, %arg1: memref<2x4x8xf32, #tpu.memory_space<vmem>>, %arg2: memref<4x4x8xf32, #tpu.memory_space<vmem>>, %arg3: memref<2x4x9xf32, #tpu.memory_space<vmem>>) attributes {dimension_semantics = [#tpu.dimension_semantics<parallel>], iteration_bounds = array<i64: 1>, scalar_prefetch = 0 : i64, scratch_operands = 0 : i64, tpu.core_type = #tpu.core_type<tc>, window_params = [{transform_indices = @transform_0, window_bounds = array<i64: 2, 4, 8>}, {pipeline_mode = #tpu.pipeline_mode<synchronous>, transform_indices = @transform_1, window_bounds = array<i64: 4, 4, 8>}, {transform_indices = @transform_2, window_bounds = array<i64: 2, 4, 9>}]} {
    %cst = arith.constant 0.000000e+00 : f32
    %0 = vector.broadcast %cst : f32 to vector<2x4x8xf32>
    %c0 = arith.constant 0 : index
    %c0_0 = arith.constant 0 : index
    %c0_1 = arith.constant 0 : index
    %1 = vector.load %arg1[%c0, %c0_0, %c0_1] : memref<2x4x8xf32, #tpu.memory_space<vmem>>, vector<2x1x8xf32>
    %2 = vector.shape_cast %1 : vector<2x1x8xf32> to vector<2x8xf32>
    %c0_2 = arith.constant 0 : index
    %c0_3 = arith.constant 0 : index
    %c0_4 = arith.constant 0 : index
    %3 = vector.load %arg2[%c0_2, %c0_3, %c0_4] : memref<4x4x8xf32, #tpu.memory_space<vmem>>, vector<1x4x8xf32>
    %4 = vector.shape_cast %3 : vector<1x4x8xf32> to vector<4x8xf32>
    %5 = vector.shape_cast %2 : vector<2x8xf32> to vector<2x1x8xf32>
    %6 = vector.shape_cast %4 : vector<4x8xf32> to vector<1x4x8xf32>
    %7 = vector.broadcast %5 : vector<2x1x8xf32> to vector<2x4x8xf32>
    %8 = vector.broadcast %6 : vector<1x4x8xf32> to vector<2x4x8xf32>
    %9 = arith.mulf %7, %8 : vector<2x4x8xf32>
    %10 = arith.addf %0, %9 : vector<2x4x8xf32>
    %c0_5 = arith.constant 0 : index
    %c1 = arith.constant 1 : index
    %c0_6 = arith.constant 0 : index
    %11 = vector.load %arg1[%c0_5, %c1, %c0_6] : memref<2x4x8xf32, #tpu.memory_space<vmem>>, vector<2x1x8xf32>
    %12 = vector.shape_cast %11 : vector<2x1x8xf32> to vector<2x8xf32>
    %c1_7 = arith.constant 1 : index
    %c0_8 = arith.constant 0 : index
    %c0_9 = arith.constant 0 : index
    %13 = vector.load %arg2[%c1_7, %c0_8, %c0_9] : memref<4x4x8xf32, #tpu.memory_space<vmem>>, vector<1x4x8xf32>
    %14 = vector.shape_cast %13 : vector<1x4x8xf32> to vector<4x8xf32>
    %15 = vector.shape_cast %12 : vector<2x8xf32> to vector<2x1x8xf32>
    %16 = vector.shape_cast %14 : vector<4x8xf32> to vector<1x4x8xf32>
    %17 = vector.broadcast %15 : vector<2x1x8xf32> to vector<2x4x8xf32>
    %18 = vector.broadcast %16 : vector<1x4x8xf32> to vector<2x4x8xf32>
    %19 = arith.mulf %17, %18 : vector<2x4x8xf32>
    %20 = arith.addf %10, %19 : vector<2x4x8xf32>
    %c0_10 = arith.constant 0 : index
    %c2 = arith.constant 2 : index
    %c0_11 = arith.constant 0 : index
    %21 = vector.load %arg1[%c0_10, %c2, %c0_11] : memref<2x4x8xf32, #tpu.memory_space<vmem>>, vector<2x1x8xf32>
    %22 = vector.shape_cast %21 : vector<2x1x8xf32> to vector<2x8xf32>
    %c2_12 = arith.constant 2 : index
    %c0_13 = arith.constant 0 : index
    %c0_14 = arith.constant 0 : index
    %23 = vector.load %arg2[%c2_12, %c0_13, %c0_14] : memref<4x4x8xf32, #tpu.memory_space<vmem>>, vector<1x4x8xf32>
    %24 = vector.shape_cast %23 : vector<1x4x8xf32> to vector<4x8xf32>
    %25 = vector.shape_cast %22 : vector<2x8xf32> to vector<2x1x8xf32>
    %26 = vector.shape_cast %24 : vector<4x8xf32> to vector<1x4x8xf32>
    %27 = vector.broadcast %25 : vector<2x1x8xf32> to vector<2x4x8xf32>
    %28 = vector.broadcast %26 : vector<1x4x8xf32> to vector<2x4x8xf32>
    %29 = arith.mulf %27, %28 : vector<2x4x8xf32>
    %30 = arith.addf %20, %29 : vector<2x4x8xf32>
    %c0_15 = arith.constant 0 : index
    %c3 = arith.constant 3 : index
    %c0_16 = arith.constant 0 : index
    %31 = vector.load %arg1[%c0_15, %c3, %c0_16] : memref<2x4x8xf32, #tpu.memory_space<vmem>>, vector<2x1x8xf32>
    %32 = vector.shape_cast %31 : vector<2x1x8xf32> to vector<2x8xf32>
    %c3_17 = arith.constant 3 : index
    %c0_18 = arith.constant 0 : index
    %c0_19 = arith.constant 0 : index
    %33 = vector.load %arg2[%c3_17, %c0_18, %c0_19] : memref<4x4x8xf32, #tpu.memory_space<vmem>>, vector<1x4x8xf32>
    %34 = vector.shape_cast %33 : vector<1x4x8xf32> to vector<4x8xf32>
    %35 = vector.shape_cast %32 : vector<2x8xf32> to vector<2x1x8xf32>
    %36 = vector.shape_cast %34 : vector<4x8xf32> to vector<1x4x8xf32>
    %37 = vector.broadcast %35 : vector<2x1x8xf32> to vector<2x4x8xf32>
    %38 = vector.broadcast %36 : vector<1x4x8xf32> to vector<2x4x8xf32>
    %39 = arith.mulf %37, %38 : vector<2x4x8xf32>
    %40 = arith.addf %30, %39 : vector<2x4x8xf32>
    %cst_20 = arith.constant 0.000000e+00 : f32
    %41 = vector.broadcast %cst_20 : f32 to vector<2x4x1xf32>
    %42 = tpu.concatenate %40, %41 in 2 : vector<2x4x8xf32>, vector<2x4x1xf32> -> vector<2x4x9xf32>
    %c0_21 = arith.constant 0 : index
    %c0_22 = arith.constant 0 : index
    %c0_23 = arith.constant 0 : index
    %43 = vector.load %arg3[%c0_21, %c0_22, %c0_23] : memref<2x4x9xf32, #tpu.memory_space<vmem>>, vector<2x4x9xf32>
    tpu.vector_store %arg3[%c0_21, %c0_22, %c0_23], %42 {strides = array<i32>} : memref<2x4x9xf32, #tpu.memory_space<vmem>>, vector<2x4x9xf32>,
    return
  }
  func.func @transform_0(%arg0: i32) -> (i32, i32, i32) {
    %c0_i32 = arith.constant 0 : i32
    %c0_i32_0 = arith.constant 0 : i32
    %c0_i32_1 = arith.constant 0 : i32
    return %arg0, %c0_i32, %c0_i32_0 : i32, i32, i32
  }
  func.func @transform_1(%arg0: i32) -> (i32, i32, i32) {
    %c0_i32 = arith.constant 0 : i32
    %c0_i32_0 = arith.constant 0 : i32
    %c0_i32_1 = arith.constant 0 : i32
    %c0_i32_2 = arith.constant 0 : i32
    return %c0_i32, %c0_i32_0, %c0_i32_1 : i32, i32, i32
  }
  func.func @transform_2(%arg0: i32) -> (i32, i32, i32) {
    %c0_i32 = arith.constant 0 : i32
    %c0_i32_0 = arith.constant 0 : i32
    %c0_i32_1 = arith.constant 0 : i32
    return %arg0, %c0_i32, %c0_i32_0 : i32, i32, i32
  }
}

</mosaic_0001>

<llo_original>
// kernel: tpu_custom_call.1
$region0: #{tpu_custom_call.1}
  #allocation0 [shape = 'u32[]', space=smem, size = 0x4, offset = 0x4, fixed_abs, tag = 'smem constant byte address 0x4 - core index']
  #allocation1 [shape = 'u32[144,128]{1,0:T(1,128)}', space=vmem, size = 0x12000, scoped, tag = 'internal scratch']
  %s0 = inlined_call_operand.hbm [shape: f32[2,4,8], index: 0, kind: input, shape index: {}]
  %s1 = inlined_call_operand.hbm [shape: f32[4,4,8], index: 1, kind: input, shape index: {}]
  %s2 = inlined_call_operand.hbm [shape: f32[2,4,9], index: 2, kind: output, shape index: {}]
  %s3 = sld [smem:[#allocation0]]
  $region26: #{tpu_custom_call.1} parent=0
    _
  %s5 = ssub.s32 1, %s3
  %s6 = scalar_select 0, %s5, %s3
  $region1: #{tpu_custom_call.1} parent=0
    #allocation2 [shape = 'u8[4096]{0}', space=vmem, size = 0x1000, scoped, tag = 'input window, operand 0, single buffered']
    #allocation3 [shape = 's32[1]{0}', space=sflag, size = 0x4, scoped, tag = 'scoped memory for tpu_custom_call.1']
    #allocation4 [shape = 's32[1]{0}', space=sflag, size = 0x4, scoped, tag = 'scoped memory for tpu_custom_call.1']
    #allocation5 [shape = 'u8[8192]{0}', space=vmem, size = 0x2000, scoped, tag = 'input window, operand 1, single buffered']
    #allocation6 [shape = 's32[1]{0}', space=sflag, size = 0x4, scoped, tag = 'scoped memory for tpu_custom_call.1']
    #allocation7 [shape = 'u8[4096]{0}', space=vmem, size = 0x1000, scoped, tag = 'output window, operand 0, single buffered']
    %7 = vsyncpa [#allocation3], 0
    %8 = vsyncpa [#allocation6], 0
    %9 = vsyncpa [#allocation4], 0
    // Predicated region
    $region2: #{tpu_custom_call.1} parent=1 // pred_check
      _
    $region3: #{tpu_custom_call.1} parent=1 // pred_check_branch
      %11 = sbr.rel (0) target = $region5
    $region4: #{tpu_custom_call.1} parent=1 // pred_region
      %s13 = ssub.s32 128, 128
      %14 = vsyncadd [#allocation3], %s13
      %s15 = sshll.u32 [#allocation2], 4
      %s16 = int_to_ptr.vmem [resolvable:$true] %s15
      %21 = dma.hbm_to_vmem [thread:$0]  %s0, 128, %s16, [#allocation3], 64, 64, 4
    $region5: #{tpu_custom_call.1} parent=1 // pred_fallthru
      _
    // Predicated region
    $region6: #{tpu_custom_call.1} parent=1 // pred_check
      _
    $region7: #{tpu_custom_call.1} parent=1 // pred_check_branch
      %23 = sbr.rel (0) target = $region9
    $region8: #{tpu_custom_call.1} parent=1 // pred_region
      %s25 = ssub.s32 256, 256
      %26 = vsyncadd [#allocation6], %s25
      %s27 = sshll.u32 [#allocation5], 4
      %s28 = int_to_ptr.vmem [resolvable:$true] %s27
      %33 = dma.hbm_to_vmem [thread:$0]  %s1, 256, %s28, [#allocation6], 64, 64, 4
    $region9: #{tpu_custom_call.1} parent=1 // pred_fallthru
      _
    // Predicated region
    $region10: #{tpu_custom_call.1} parent=1 // pred_check
      _
    $region11: #{tpu_custom_call.1} parent=1 // pred_check_branch
      %35 = sbr.rel (0) target = $region13
    $region12: #{tpu_custom_call.1} parent=1 // pred_region
      %36 = dma.done [#allocation3], 128
    $region13: #{tpu_custom_call.1} parent=1 // pred_fallthru
      _
    // Predicated region
    $region14: #{tpu_custom_call.1} parent=1 // pred_check
      _
    $region15: #{tpu_custom_call.1} parent=1 // pred_check_branch
      %38 = sbr.rel (0) target = $region17
    $region16: #{tpu_custom_call.1} parent=1 // pred_region
      %39 = dma.done [#allocation6], 256
    $region17: #{tpu_custom_call.1} parent=1 // pred_fallthru
      _
    %v40 = vld [vmem:[#allocation2] sm:$0x1]
    %v41 = vld [vmem:[#allocation2 + $0x4] sm:$0x1]
    %v42 = vld [vmem:[#allocation5] sm:$0xf]
    %v43 = vlaneseq
    %v44 = vshrl.u32 %v43, 7
    %v45 = vsub.s32 0, %v44
    %v46 = vrot.slane %v40, %v45
    %v47 = vlaneseq
    %v48 = vshrl.u32 %v47, 7
    %v49 = vsub.s32 0, %v48
    %v50 = vrot.slane %v41, %v49
    %v51 = vmul.f32 %v46, %v42
    %v52 = vmul.f32 %v50, %v42
    %v53 = vadd.f32 %v51, 0.0
    %v54 = vadd.f32 %v52, 0.0
    %v55 = vld [vmem:[#allocation2 + $0x1] sm:$0x1]
    %v56 = vld [vmem:[#allocation2 + $0x5] sm:$0x1]
    %s57 = scalar_lea.vmem [#allocation5], 4
    %v58 = vld [vmem:[%s57] sm:$0xf]
    %v59 = vlaneseq
    %v60 = vshrl.u32 %v59, 7
    %v61 = vsub.s32 0, %v60
    %v62 = vrot.slane %v55, %v61
    %v63 = vlaneseq
    %v64 = vshrl.u32 %v63, 7
    %v65 = vsub.s32 0, %v64
    %v66 = vrot.slane %v56, %v65
    %v67 = vmul.f32 %v62, %v58
    %v68 = vmul.f32 %v66, %v58
    %v69 = vadd.f32 %v53, %v67
    %v70 = vadd.f32 %v54, %v68
    %v71 = vld [vmem:[#allocation2 + $0x2] sm:$0x1]
    %v72 = vld [vmem:[#allocation2 + $0x6] sm:$0x1]
    %s73 = scalar_lea.vmem [#allocation5], 8
    %v74 = vld [vmem:[%s73] sm:$0xf]
    %v75 = vlaneseq
    %v76 = vshrl.u32 %v75, 7
    %v77 = vsub.s32 0, %v76
    %v78 = vrot.slane %v71, %v77
    %v79 = vlaneseq
    %v80 = vshrl.u32 %v79, 7
    %v81 = vsub.s32 0, %v80
    %v82 = vrot.slane %v72, %v81
    %v83 = vmul.f32 %v78, %v74
    %v84 = vmul.f32 %v82, %v74
    %v85 = vadd.f32 %v69, %v83
    %v86 = vadd.f32 %v70, %v84
    %v87 = vld [vmem:[#allocation2 + $0x3] sm:$0x1]
    %v88 = vld [vmem:[#allocation2 + $0x7] sm:$0x1]
    %s89 = scalar_lea.vmem [#allocation5], 12
    %v90 = vld [vmem:[%s89] sm:$0xf]
    %v91 = vlaneseq
    %v92 = vshrl.u32 %v91, 7
    %v93 = vsub.s32 0, %v92
    %v94 = vrot.slane %v87, %v93
    %v95 = vlaneseq
    %v96 = vshrl.u32 %v95, 7
    %v97 = vsub.s32 0, %v96
    %v98 = vrot.slane %v88, %v97
    %v99 = vmul.f32 %v94, %v90
    %v100 = vmul.f32 %v98, %v90
    %v101 = vadd.f32 %v85, %v99
    %v102 = vadd.f32 %v86, %v100
    %vm103 = vcmask 64512
    %v104 = vsel %vm103, %v101, 0.0
    %v105 = vsel %vm103, %v102, 0.0
    %vm106 = vcmask 68608
    %107 = vst.msk [vmem:[#allocation7] sm:$0xf] %vm106, %v104
    %108 = vst.msk [vmem:[#allocation7 + $0x4] sm:$0xf] %vm106, %v105
    // Predicated region
    $region18: #{tpu_custom_call.1} parent=1 // pred_check
      _
    $region19: #{tpu_custom_call.1} parent=1 // pred_check_branch
      %110 = sbr.rel (0) target = $region21
    $region20: #{tpu_custom_call.1} parent=1 // pred_region
      %s112 = ssub.s32 128, 128
      %113 = vsyncadd [#allocation4], %s112
      %s114 = sshll.u32 [#allocation7], 4
      %s115 = int_to_ptr.vmem [resolvable:$true] %s114
      %120 = dma.vmem_to_hbm [thread:$0]  %s115, 128, %s2, [#allocation4], 64, 64, 4
    $region21: #{tpu_custom_call.1} parent=1 // pred_fallthru
      _
    // Predicated region
    $region22: #{tpu_custom_call.1} parent=1 // pred_check
      _
    $region23: #{tpu_custom_call.1} parent=1 // pred_check_branch
      %122 = sbr.rel (0) target = $region25
    $region24: #{tpu_custom_call.1} parent=1 // pred_region
      %123 = dma.done [#allocation4], 128
    $region25: #{tpu_custom_call.1} parent=1 // pred_fallthru
      _
    %124 = vsyncpa [#allocation3], 1
    %125 = vsyncpa [#allocation6], 1
    %126 = vsyncpa [#allocation4], 1

</llo_original>
